<compile_context>
chip_gen: v6e
topology: v6e:2x2x1
jax: 0.10.0
libtpu: 0.0.40
codegen_flags: <defaults>
</compile_context>

<pallas_src>
import functools

import jax
import jax.numpy as jnp
from jax.experimental import pallas as pl
from jax.experimental.pallas import tpu as pltpu


# ----------------------------- per-row math ---------------------------------


def _power_term(w, gamma: float):
    """(1 - pt) ** gamma; unrolled multiplies for small non-negative int gamma."""
    g = float(gamma)
    if g.is_integer() and 0 <= g <= 8:
        gi = int(g)
        if gi == 0:
            return jnp.ones_like(w)
        out = w
        for _ in range(gi - 1):
            out = out * w
        return out
    return w ** g


def _focal_per_row(x, t, alpha: float, gamma: float):
    """x: (BN, C) f32 logits, t: (BN, 1) int32 -> (BN, 1) f32 focal loss."""
    c = x.shape[-1]

    # Numerically stable log-sum-exp over classes.
    m = jnp.max(x, axis=-1, keepdims=True)                          # (BN, 1)
    lse = m + jnp.log(jnp.sum(jnp.exp(x - m), axis=-1, keepdims=True))

    # Gather the target-class logit with a one-hot compare (no gather op).
    class_ids = jax.lax.broadcasted_iota(jnp.int32, x.shape, 1)     # (BN, C)
    onehot = (class_ids == t).astype(jnp.float32)
    tgt_logit = jnp.sum(x * onehot, axis=-1, keepdims=True)         # (BN, 1)

    ce = lse - tgt_logit                                            # (BN, 1)

    # Out-of-range targets (e.g. ignore_index=-100) contribute exactly 0,
    # matching F.cross_entropy(reduction='none') followed by torch.mean.
    in_range = jnp.logical_and(t >= 0, t < c)
    ce = jnp.where(in_range, ce, 0.0)

    pt = jnp.exp(-ce)
    w = 1.0 - pt
    return alpha * _power_term(w, gamma) * ce                       # (BN, 1)


# ------------------------------- kernels -------------------------------------


def _make_partial_sum_kernel(alpha: float, gamma: float, n_total: int,
                             block_n: int):
    """Each grid step writes its tile's focal-loss sum to a (1, 128) slab."""

    def kernel(x_ref, t_ref, out_ref):
        i = pl.program_id(0)
        x = x_ref[...].astype(jnp.float32)          # (BLOCK_N, C)
        t = t_ref[...]                              # (BLOCK_N, 1) int32

        focal = _focal_per_row(x, t, alpha, gamma)  # (BLOCK_N, 1)

        # Mask rows past the true batch size (partial last block).
        row = i * block_n + jax.lax.broadcasted_iota(jnp.int32, focal.shape, 0)
        focal = jnp.where(row < n_total, focal, 0.0)

        psum = jnp.sum(focal)                       # scalar
        out_ref[...] = jnp.broadcast_to(
            jnp.reshape(psum, (1, 1)), out_ref.shape).astype(out_ref.dtype)

    return kernel


def _make_per_sample_kernel(alpha: float, gamma: float):
    """reduction='none': write per-sample focal values for this tile."""

    def kernel(x_ref, t_ref, out_ref):
        x = x_ref[...].astype(jnp.float32)
        t = t_ref[...]
        out_ref[...] = _focal_per_row(x, t, alpha, gamma).astype(out_ref.dtype)

    return kernel


# ------------------------------- wrapper --------------------------------------


def _choose_block_n(n: int, c: int, itemsize: int) -> int:
    """~2 MiB logit tiles (85%+ of HBM roofline), multiple of 8, <= batch."""
    if n <= 8:
        return n                       # single block equal to full batch dim
    target_bytes = 2 * 1024 * 1024
    bn = max(8, (target_bytes // max(1, c * itemsize)) // 8 * 8)
    bn = min(bn, 4096)                 # keep double-buffered footprint modest
    bn = min(bn, (n // 8) * 8)         # never exceed the array's batch extent
    return int(bn)


@functools.partial(jax.jit, static_argnames=("alpha", "gamma", "reduction"))
def focal_loss(inputs, targets, alpha=2.0, gamma=3.0, reduction="mean"):
    """Pallas-TPU focal loss. inputs: (N, C) float (f32/bf16), targets: (N,) int."""
    n, c = inputs.shape
    alpha = float(alpha)
    gamma = float(gamma)
    targets2d = targets.astype(jnp.int32).reshape(n, 1)

    itemsize = jnp.dtype(inputs.dtype).itemsize
    block_n = _choose_block_n(n, c, itemsize)
    num_blocks = pl.cdiv(n, block_n)

    # Explicit VMEM budget: 2x double-buffered (logits + targets) + headroom.
    tile_bytes = block_n * c * itemsize + block_n * 4
    vmem_limit = int(min(100 * 1024 * 1024,
                         max(8 * 1024 * 1024, 4 * tile_bytes + 2 * 1024 * 1024)))
    compiler_params = pltpu.CompilerParams(
        dimension_semantics=("parallel",),      # per-block outputs -> both v7x TCs
        vmem_limit_bytes=vmem_limit,
    )

    in_specs = [
        pl.BlockSpec((block_n, c), lambda i: (i, 0)),
        pl.BlockSpec((block_n, 1), lambda i: (i, 0)),
    ]

    if reduction == "none":
        out = pl.pallas_call(
            _make_per_sample_kernel(alpha, gamma),
            out_shape=jax.ShapeDtypeStruct((n, 1), jnp.float32),
            grid=(num_blocks,),
            in_specs=in_specs,
            out_specs=pl.BlockSpec((block_n, 1), lambda i: (i, 0)),
            compiler_params=compiler_params,
        )(inputs, targets2d)
        return out[:, 0]

    # 'mean' / 'sum': lane-dense per-block partial sums, finalized outside.
    partials = pl.pallas_call(
        _make_partial_sum_kernel(alpha, gamma, n, block_n),
        out_shape=jax.ShapeDtypeStruct((1, num_blocks * 128), jnp.float32),
        grid=(num_blocks,),
        in_specs=in_specs,
        out_specs=pl.BlockSpec((1, 128), lambda i: (0, i)),
        compiler_params=compiler_params,
    )(inputs, targets2d)

    total = jnp.sum(partials.reshape(num_blocks, 128)[:, 0])
    if reduction == "mean":
        return total / jnp.float32(n)     # divide by the true N, exactly once
    return total                           # 'sum'


# ------------------------------- demo / check ---------------------------------


def _ref_focal(x, t, alpha, gamma, reduction):
    logp = jax.nn.log_softmax(x.astype(jnp.float32), axis=-1)
    ce = -jnp.take_along_axis(logp, t[:, None], axis=-1)[:, 0]
    pt = jnp.exp(-ce)
    f = alpha * (1.0 - pt) ** gamma * ce
    if reduction == "mean":
        return jnp.mean(f)
    if reduction == "sum":
        return jnp.sum(f)
    return f


if __name__ == "__main__":
    key = jax.random.PRNGKey(0)
    k_x, k_t = jax.random.split(key)

    N, C = 8, 32
    x = jax.random.normal(k_x, (N, C), dtype=jnp.float32)
    t = jax.random.randint(k_t, (N,), 0, C, dtype=jnp.int32)

    # mean
    loss = focal_loss(x, t, alpha=2, gamma=3, reduction="mean")
    jax.block_until_ready(loss)
    ref = _ref_focal(x, t, 2.0, 3.0, "mean")
    assert jnp.allclose(loss, ref, rtol=1e-5, atol=1e-5), (loss, ref)

    # sum
    s = focal_loss(x, t, alpha=2, gamma=3, reduction="sum")
    assert jnp.allclose(s, _ref_focal(x, t, 2.0, 3.0, "sum"),
                        rtol=1e-5, atol=1e-5)

    # none (per-sample)
    f_none = focal_loss(x, t, alpha=2, gamma=3, reduction="none")
    assert jnp.allclose(f_none, _ref_focal(x, t, 2.0, 3.0, "none"),
                        rtol=1e-5, atol=1e-5)

    # ragged batch (N not a multiple of the 8-row block): exercises the
    # in-kernel row mask and the true-N mean denominator.
    N2 = 10
    x2 = jax.random.normal(k_x, (N2, C), dtype=jnp.float32)
    t2 = jax.random.randint(k_t, (N2,), 0, C, dtype=jnp.int32)
    loss2 = focal_loss(x2, t2, alpha=2, gamma=3, reduction="mean")
    assert jnp.allclose(loss2, _ref_focal(x2, t2, 2.0, 3.0, "mean"),
                        rtol=1e-5, atol=1e-5), (loss2,)

    # bf16 logits are accepted directly (kernel upcasts in VMEM); sanity check.
    loss_bf16 = focal_loss(x.astype(jnp.bfloat16), t, alpha=2, gamma=3,
                           reduction="mean")
    jax.block_until_ready(loss_bf16)
    assert bool(jnp.isfinite(loss_bf16))

    print("KERNEL_OK")
</pallas_src>

<mosaic_0001>
module attributes {stable_mosaic.version = 11 : i64} {
  func.func @kernel(%arg0: i32, %arg1: memref<8x32xf32, #tpu.memory_space<vmem>>, %arg2: memref<8x1xi32, #tpu.memory_space<vmem>>, %arg3: memref<1x128xf32, #tpu.memory_space<vmem>>) attributes {dimension_semantics = [#tpu.dimension_semantics<parallel>], iteration_bounds = array<i64: 1>, scalar_prefetch = 0 : i64, scratch_operands = 0 : i64, tpu.core_type = #tpu.core_type<tc>, window_params = [{transform_indices = @transform_0, window_bounds = array<i64: 8, 32>}, {transform_indices = @transform_1, window_bounds = array<i64: 8, 1>}, {transform_indices = @transform_2, window_bounds = array<i64: 1, 128>}]} {
    %c0 = arith.constant 0 : index
    %c0_0 = arith.constant 0 : index
    %0 = vector.load %arg1[%c0, %c0_0] : memref<8x32xf32, #tpu.memory_space<vmem>>, vector<8x32xf32>
    %c0_1 = arith.constant 0 : index
    %c0_2 = arith.constant 0 : index
    %1 = vector.load %arg2[%c0_1, %c0_2] : memref<8x1xi32, #tpu.memory_space<vmem>>, vector<8x1xi32>
    %cst = arith.constant dense<0xFF800000> : vector<8xf32>
    %2 = vector.multi_reduction <maximumf>, %0, %cst [1] : vector<8x32xf32> to vector<8xf32>
    %3 = vector.shape_cast %2 : vector<8xf32> to vector<8x1xf32>
    %4 = vector.broadcast %3 : vector<8x1xf32> to vector<8x32xf32>
    %5 = arith.subf %0, %4 : vector<8x32xf32>
    %6 = math.exp %5 : vector<8x32xf32>
    %cst_3 = arith.constant dense<0.000000e+00> : vector<8xf32>
    %7 = vector.multi_reduction <add>, %6, %cst_3 [1] : vector<8x32xf32> to vector<8xf32>
    %8 = vector.shape_cast %7 : vector<8xf32> to vector<8x1xf32>
    %9 = math.log %8 : vector<8x1xf32>
    %10 = arith.addf %3, %9 : vector<8x1xf32>
    %11 = tpu.iota {dimensions = array<i32: 1>} : vector<8x32xi32>
    %12 = vector.broadcast %1 : vector<8x1xi32> to vector<8x32xi32>
    %13 = arith.cmpi eq, %11, %12 : vector<8x32xi32>
    %14 = arith.extui %13 : vector<8x32xi1> to vector<8x32xi32>
    %15 = arith.sitofp %14 : vector<8x32xi32> to vector<8x32xf32>
    %16 = arith.mulf %0, %15 : vector<8x32xf32>
    %cst_4 = arith.constant dense<0.000000e+00> : vector<8xf32>
    %17 = vector.multi_reduction <add>, %16, %cst_4 [1] : vector<8x32xf32> to vector<8xf32>
    %18 = vector.shape_cast %17 : vector<8xf32> to vector<8x1xf32>
    %19 = arith.subf %10, %18 : vector<8x1xf32>
    %c0_i32 = arith.constant 0 : i32
    %20 = vector.broadcast %c0_i32 : i32 to vector<8x1xi32>
    %21 = arith.cmpi sge, %1, %20 : vector<8x1xi32>
    %c32_i32 = arith.constant 32 : i32
    %22 = vector.broadcast %c32_i32 : i32 to vector<8x1xi32>
    %23 = arith.cmpi slt, %1, %22 : vector<8x1xi32>
    %24 = arith.andi %21, %23 : vector<8x1xi1>
    %cst_5 = arith.constant 0.000000e+00 : f32
    %25 = vector.broadcast %cst_5 : f32 to vector<8x1xf32>
    %26 = arith.select %24, %19, %25 : vector<8x1xi1>, vector<8x1xf32>
    %cst_6 = arith.constant 0.000000e+00 : f32
    %27 = vector.broadcast %cst_6 : f32 to vector<8x1xf32>
    %28 = arith.subf %27, %26 : vector<8x1xf32>
    %29 = math.exp %28 : vector<8x1xf32>
    %cst_7 = arith.constant 1.000000e+00 : f32
    %30 = vector.broadcast %cst_7 : f32 to vector<8x1xf32>
    %31 = arith.subf %30, %29 : vector<8x1xf32>
    %32 = arith.mulf %31, %31 : vector<8x1xf32>
    %33 = arith.mulf %32, %31 : vector<8x1xf32>
    %cst_8 = arith.constant 2.000000e+00 : f32
    %34 = vector.broadcast %cst_8 : f32 to vector<8x1xf32>
    %35 = arith.mulf %34, %33 : vector<8x1xf32>
    %36 = arith.mulf %35, %26 : vector<8x1xf32>
    %c8_i32 = arith.constant 8 : i32
    %37 = arith.muli %arg0, %c8_i32 : i32
    %38 = tpu.iota {dimensions = array<i32: 0>} : vector<8x1xi32>
    %39 = vector.broadcast %37 : i32 to vector<8x1xi32>
    %40 = arith.addi %39, %38 : vector<8x1xi32>
    %c8_i32_9 = arith.constant 8 : i32
    %41 = vector.broadcast %c8_i32_9 : i32 to vector<8x1xi32>
    %42 = arith.cmpi slt, %40, %41 : vector<8x1xi32>
    %cst_10 = arith.constant 0.000000e+00 : f32
    %43 = vector.broadcast %cst_10 : f32 to vector<8x1xf32>
    %44 = arith.select %42, %36, %43 : vector<8x1xi1>, vector<8x1xf32>
    %45 = vector.shape_cast %44 : vector<8x1xf32> to vector<1x8x1xf32>
    %cst_11 = arith.constant dense<0.000000e+00> : vector<1xf32>
    %46 = vector.multi_reduction <add>, %45, %cst_11 [1, 2] : vector<1x8x1xf32> to vector<1xf32>
    %47 = vector.shape_cast %46 : vector<1xf32> to vector<1x1x1xf32>
    %48 = vector.extract %47[0, 0, 0] : f32 from vector<1x1x1xf32>
    %49 = vector.broadcast %48 : f32 to vector<1x1xf32>
    %50 = vector.shape_cast %49 : vector<1x1xf32> to vector<1x1xf32>
    %51 = vector.broadcast %50 : vector<1x1xf32> to vector<1x128xf32>
    %c0_12 = arith.constant 0 : index
    %c0_13 = arith.constant 0 : index
    %52 = vector.load %arg3[%c0_12, %c0_13] : memref<1x128xf32, #tpu.memory_space<vmem>>, vector<1x128xf32>
    tpu.vector_store %arg3[%c0_12, %c0_13], %51 {strides = array<i32>} : memref<1x128xf32, #tpu.memory_space<vmem>>, vector<1x128xf32>,
    return
  }
  func.func @transform_0(%arg0: i32) -> (i32, i32) {
    %c0_i32 = arith.constant 0 : i32
    %c0_i32_0 = arith.constant 0 : i32
    return %arg0, %c0_i32 : i32, i32
  }
  func.func @transform_1(%arg0: i32) -> (i32, i32) {
    %c0_i32 = arith.constant 0 : i32
    %c0_i32_0 = arith.constant 0 : i32
    return %arg0, %c0_i32 : i32, i32
  }
  func.func @transform_2(%arg0: i32) -> (i32, i32) {
    %c0_i32 = arith.constant 0 : i32
    %c0_i32_0 = arith.constant 0 : i32
    return %c0_i32, %arg0 : i32, i32
  }
}

</mosaic_0001>

<llo_original>
// kernel: focal_loss.1
$region0: #{focal_loss.1}
  #allocation0 [shape = 'u32[]', space=smem, size = 0x4, offset = 0x4, fixed_abs, tag = 'smem constant byte address 0x4 - core index']
  #allocation1 [shape = 'u32[144,128]{1,0:T(1,128)}', space=vmem, size = 0x12000, scoped, tag = 'internal scratch']
  %s0 = inlined_call_operand.vmem [shape: f32[8,32], index: 0, kind: input, shape index: {}]
  %s1 = inlined_call_operand.vmem [shape: s32[8,1], index: 1, kind: input, shape index: {}]
  %s2 = inlined_call_operand.vmem [shape: f32[1,128], index: 2, kind: output, shape index: {}]
  %s3 = sld [smem:[#allocation0]]
  $region18: #{focal_loss.1} parent=0
    _
  %s5 = ssub.s32 1, %s3
  %s6 = scalar_select 0, %s5, %s3
  // Predicated region
  $region2: #{focal_loss.1} parent=0 // pred_check
    _
  $region3: #{focal_loss.1} parent=0 // pred_check_branch
    %8 = sbr.rel (0) target = $region5
  $region4: #{focal_loss.1} parent=0 // pred_region
    _
  $region5: #{focal_loss.1} parent=0 // pred_fallthru
    _
  // Predicated region
  $region6: #{focal_loss.1} parent=0 // pred_check
    _
  $region7: #{focal_loss.1} parent=0 // pred_check_branch
    %10 = sbr.rel (0) target = $region9
  $region8: #{focal_loss.1} parent=0 // pred_region
    _
  $region9: #{focal_loss.1} parent=0 // pred_fallthru
    _
  %v11 = vld [vmem:[%s0] sm:$0xff]
  %v12 = vld [vmem:[%s1] sm:$0xff]
  %vm13 = vcmask 261120
  %v14 = vsel %vm13, %v11, -inf
  %15 = vmax.xlane.f32.xlu0 %v14
  %v16 = vpop.xlane.xlu0 %15
  %v17 = vsub.f32 %v11, %v16
  %v18 = vmul.f32 %v17, 1.442695
  %v19 = vpow.pop %v18
  %v20 = vsel %vm13, %v19, 0.0
  %21 = vadd.xlane.f32.xlu0 %v20
  %v22 = vpop.xlane.xlu0 %21
  %v23 = vlog2.pop %v22
  %v24 = vmul.f32 %v23, 0.6931472
  %v25 = vadd.f32 %v16, %v24
  %v26 = vlaneseq
  %v27 = vand.u32 %v26, 127
  %28 = vset.pattern.permute.xlu0 0
  %29 = vperm.xlu0 %28, %v12
  %v30 = vpop.permute.xlu0 %29
  %vm31 = vcmp.eq.s32.totalorder %v27, %v30
  %v32 = vsel %vm31, 1, 0
  %v33 = vcvt.s32.f32 %v32
  %v34 = vmul.f32 %v11, %v33
  %v35 = vsel %vm13, %v34, 0.0
  %36 = vadd.xlane.f32.xlu0 %v35
  %v37 = vpop.xlane.xlu0 %36
  %v38 = vsub.f32 %v25, %v37
  %vm39 = vcmp.ge.s32.totalorder %v12, 0
  %vm40 = vcmp.lt.s32.totalorder %v12, 32
  %vm41 = vmand %vm39, %vm40
  %v42 = vsel %vm41, %v38, 0.0
  %v43 = vsub.f32 0.0, %v42
  %v44 = vmul.f32 %v43, 1.442695
  %v45 = vpow.pop %v44
  %v46 = vsub.f32 1.0, %v45
  %v47 = vmul.f32 %v46, %v46
  %v48 = vmul.f32 %v47, %v46
  %v49 = vmul.f32 %v48, 2.0
  %v50 = vmul.f32 %v49, %v42
  %s51 = smul.u32 0, 8
  %v52 = vlaneseq
  %v53 = vshrl.u32 %v52, 7
  %v54 = vstv %s51
  %v55 = vadd.s32 %v54, %v53
  %vm56 = vcmp.lt.s32.totalorder %v55, 8
  %v57 = vsel %vm56, %v50, 0.0
  %vm58 = vcmask 7168
  %v59 = vsel %vm58, %v57, 0.0
  %60 = vadd.xlane.f32.xlu0 %v59
  %v61 = vpop.xlane.xlu0 %60
  %v62 = vrot.slane %v61, 4
  %v63 = vadd.f32 %v61, %v62
  %v64 = vrot.slane %v63, 2
  %v65 = vadd.f32 %v63, %v64
  %v66 = vrot.slane %v65, 1
  %v67 = vadd.f32 %v65, %v66
  %s68 = vtos %v67
  %v69 = vstv %s68
  %70 = vst [vmem:[%s2] sm:$0x1] %v69
  // Predicated region
  $region10: #{focal_loss.1} parent=0 // pred_check
    _
  $region11: #{focal_loss.1} parent=0 // pred_check_branch
    %72 = sbr.rel (0) target = $region13
  $region12: #{focal_loss.1} parent=0 // pred_region
    _
  $region13: #{focal_loss.1} parent=0 // pred_fallthru
    _
  // Predicated region
  $region14: #{focal_loss.1} parent=0 // pred_check
    _
  $region15: #{focal_loss.1} parent=0 // pred_check_branch
    %74 = sbr.rel (0) target = $region17
  $region16: #{focal_loss.1} parent=0 // pred_region
    _
  $region17: #{focal_loss.1} parent=0 // pred_fallthru
    _

</llo_original>
